<compile_context>
chip_gen: v7x
topology: tpu7x:2x2x1
jax: 0.10.0
libtpu: 0.0.40
codegen_flags: <defaults>
</compile_context>

<pallas_src>
from collections import deque
from typing import Any
import functools

import jax
import jax.numpy as jnp
from jax.experimental import pallas as pl
from jax.experimental.pallas import tpu as pltpu


# ----------------------------------------------------------------------------
# flatten(): exact port of the BFS tree flattening (deque-based, so the output
# order matches the PyTorch reference).
# ----------------------------------------------------------------------------
def flatten(inputs: Any) -> list[jax.Array]:
    queue = deque([inputs])
    outputs = []
    while queue:
        x = queue.popleft()
        if isinstance(x, (list, tuple)):
            queue.extend(x)
        elif isinstance(x, dict):
            queue.extend(x.values())
        elif isinstance(x, jax.Array):
            outputs.append(x)
    return outputs


# ----------------------------------------------------------------------------
# Pallas kernel for the inner synthetic model.
#   y1 = x_flat @ W + b            (bf16 operands on the MXU, f32 accumulate)
#   y2 = relu(y1)                  (f32 VPU)
#   xm = mean(x_flat, axis=-1)     (f32 XLU reduction; D is unpadded so the
#                                   mean denominator is exact)
# Single full-array block (no grid): full-array blocks are exempt from the
# (8,128) tiling rule, Mosaic handles the sublane/lane padding internally.
# ----------------------------------------------------------------------------
def _inner_model_kernel(x_ref, w_ref, b_ref, y1_ref, y2_ref, xm_ref):
    x = x_ref[...]                                            # (B, D) f32
    y = jnp.dot(x.astype(jnp.bfloat16), w_ref[...],           # bf16 MXU feed
                preferred_element_type=jnp.float32)           # f32 accumulate
    y1 = y + b_ref[...]                                       # f32 epilogue
    y1_ref[...] = y1
    y2_ref[...] = jnp.maximum(y1, 0.0)
    xm_ref[...] = jnp.mean(x, axis=-1, keepdims=True)         # (B, 1) f32


@jax.jit
def inner_model_forward(x_nchw, w_bf16, b_row):
    """Synthetic inner model. Returns a NESTED structure of arrays.

    `w_bf16` is the (D, HID) weight already cast to bf16 at init time and
    `b_row` is the (1, HID) f32 bias — no per-call pad/cast HLOs.
    """
    B, C, H, W = x_nchw.shape
    D = C * H * W
    HID = w_bf16.shape[1]

    # Channel-major flatten, identical to torch .reshape on contiguous NCHW.
    x_flat = x_nchw.reshape(B, D)

    vmem_spec = pl.BlockSpec(memory_space=pltpu.MemorySpace.VMEM)

    bytes_accessed = (x_flat.size * 4 + w_bf16.size * 2 + b_row.size * 4
                      + 2 * B * HID * 4 + B * 4)

    y1, y2, xm = pl.pallas_call(
        _inner_model_kernel,
        out_shape=(
            jax.ShapeDtypeStruct((B, HID), jnp.float32),
            jax.ShapeDtypeStruct((B, HID), jnp.float32),
            jax.ShapeDtypeStruct((B, 1), jnp.float32),
        ),
        in_specs=[vmem_spec, vmem_spec, vmem_spec],
        out_specs=(vmem_spec, vmem_spec, vmem_spec),
        cost_estimate=pl.CostEstimate(
            flops=2 * B * D * HID,
            transcendentals=0,
            bytes_accessed=bytes_accessed),
    )(x_flat, w_bf16, b_row)

    # Nested output structure exercising dict / list / tuple handling.
    return {"linear": y1, "extras": [y2, (xm,)]}


# ----------------------------------------------------------------------------
# Flatten module equivalent: run inner model, BFS-flatten nested outputs.
# ----------------------------------------------------------------------------
class Flatten:
    def __init__(self, model):
        self.model = model

    def __call__(self, *args, **kwargs) -> list[jax.Array]:
        outputs = self.model(*args, **kwargs)
        return flatten(outputs)


if __name__ == "__main__":
    key = jax.random.PRNGKey(0)
    kx, kw, kb = jax.random.split(key, 3)

    B, C, H, W = 2, 4, 16, 16
    D = C * H * W          # 1024
    HID = 32

    x = jax.random.normal(kx, (B, C, H, W), dtype=jnp.float32)
    w = jax.random.normal(kw, (D, HID), dtype=jnp.float32) * 0.02
    b = jax.random.normal(kb, (HID,), dtype=jnp.float32) * 0.01

    # One-time (init) weight prep: bf16 cast of W, 2-D bias.  These are closed
    # over by the partial, so nothing is padded/cast on the per-call path.
    w_bf16 = w.astype(jnp.bfloat16)
    b_row = b.reshape(1, HID).astype(jnp.float32)

    model = functools.partial(inner_model_forward, w_bf16=w_bf16, b_row=b_row)
    flat_module = Flatten(lambda inp: model(inp))

    outs = flat_module(x)
    outs = [jax.block_until_ready(o) for o in outs]

    # Reference check (pure JAX).  The matmul reference applies the SAME bf16
    # operand cast + f32 accumulation the kernel feeds the MXU, so it matches
    # tightly; the mean stays f32 end-to-end with the true (unpadded) D.
    x_flat = x.reshape(B, D)
    y1_ref = jnp.dot(x_flat.astype(jnp.bfloat16), w.astype(jnp.bfloat16),
                     preferred_element_type=jnp.float32) + b
    y2_ref = jnp.maximum(y1_ref, 0.0)
    xm_ref = jnp.mean(x_flat, axis=-1, keepdims=True)
    refs = [y1_ref, y2_ref, xm_ref]   # BFS order: y1, y2, xm

    assert len(outs) == 3
    for got, ref in zip(outs, refs):
        assert got.shape == ref.shape and got.dtype == ref.dtype
        assert jnp.allclose(got, ref, atol=2e-3, rtol=2e-3), (
            float(jnp.max(jnp.abs(got - ref))))

    print("KERNEL_OK")
</pallas_src>

<mosaic_0001>
module attributes {stable_mosaic.version = 11 : i64} {
  func.func @_inner_model_kernel(%arg0: memref<2x1024xf32, #tpu.memory_space<vmem>>, %arg1: memref<1024x32xbf16, #tpu.memory_space<vmem>>, %arg2: memref<1x32xf32, #tpu.memory_space<vmem>>, %arg3: memref<2x32xf32, #tpu.memory_space<vmem>>, %arg4: memref<2x32xf32, #tpu.memory_space<vmem>>, %arg5: memref<2x1xf32, #tpu.memory_space<vmem>>) attributes {dimension_semantics = [], scalar_prefetch = 0 : i64, scratch_operands = 0 : i64, tpu.core_type = #tpu.core_type<tc>} {
    %c0 = arith.constant 0 : index
    %c0_0 = arith.constant 0 : index
    %0 = vector.load %arg0[%c0, %c0_0] : memref<2x1024xf32, #tpu.memory_space<vmem>>, vector<2x1024xf32>
    %1 = arith.truncf %0 : vector<2x1024xf32> to vector<2x1024xbf16>
    %c0_1 = arith.constant 0 : index
    %c0_2 = arith.constant 0 : index
    %2 = vector.load %arg1[%c0_1, %c0_2] : memref<1024x32xbf16, #tpu.memory_space<vmem>>, vector<1024x32xbf16>
    %cst = arith.constant dense<0.000000e+00> : vector<2x32xf32>
    %3 = tpu.matmul %1, %2, %cst {dimension_numbers = #tpu.dot_dimension_numbers<[1], [0], [0], [1], [0, 0, 1, 1], [], []>} : vector<2x1024xbf16>, vector<1024x32xbf16>, vector<2x32xf32> -> vector<2x32xf32>
    %c0_3 = arith.constant 0 : index
    %c0_4 = arith.constant 0 : index
    %4 = vector.load %arg2[%c0_3, %c0_4] : memref<1x32xf32, #tpu.memory_space<vmem>>, vector<1x32xf32>
    %5 = vector.broadcast %4 : vector<1x32xf32> to vector<2x32xf32>
    %6 = arith.addf %3, %5 : vector<2x32xf32>
    %c0_5 = arith.constant 0 : index
    %c0_6 = arith.constant 0 : index
    %7 = vector.load %arg3[%c0_5, %c0_6] : memref<2x32xf32, #tpu.memory_space<vmem>>, vector<2x32xf32>
    tpu.vector_store %arg3[%c0_5, %c0_6], %6 {strides = array<i32>} : memref<2x32xf32, #tpu.memory_space<vmem>>, vector<2x32xf32>,
    %cst_7 = arith.constant 0.000000e+00 : f32
    %8 = vector.broadcast %cst_7 : f32 to vector<2x32xf32>
    %9 = arith.maximumf %6, %8 : vector<2x32xf32>
    %c0_8 = arith.constant 0 : index
    %c0_9 = arith.constant 0 : index
    %10 = vector.load %arg4[%c0_8, %c0_9] : memref<2x32xf32, #tpu.memory_space<vmem>>, vector<2x32xf32>
    tpu.vector_store %arg4[%c0_8, %c0_9], %9 {strides = array<i32>} : memref<2x32xf32, #tpu.memory_space<vmem>>, vector<2x32xf32>,
    %cst_10 = arith.constant dense<0.000000e+00> : vector<2xf32>
    %11 = vector.multi_reduction <add>, %0, %cst_10 [1] : vector<2x1024xf32> to vector<2xf32>
    %12 = vector.shape_cast %11 : vector<2xf32> to vector<2x1xf32>
    %cst_11 = arith.constant 1.024000e+03 : f32
    %13 = vector.broadcast %cst_11 : f32 to vector<2x1xf32>
    %14 = arith.divf %12, %13 : vector<2x1xf32>
    %c0_12 = arith.constant 0 : index
    %c0_13 = arith.constant 0 : index
    %15 = vector.load %arg5[%c0_12, %c0_13] : memref<2x1xf32, #tpu.memory_space<vmem>>, vector<2x1xf32>
    tpu.vector_store %arg5[%c0_12, %c0_13], %14 {strides = array<i32>} : memref<2x1xf32, #tpu.memory_space<vmem>>, vector<2x1xf32>,
    return
  }
}

</mosaic_0001>

<llo_original>
// kernel: inner_model_forward.1
$region0: #{inner_model_forward.1}
  #allocation0 [shape = 'u32[]', space=smem, size = 0x4, offset = 0x4, fixed_abs, tag = 'smem constant byte address 0x4 - core index']
  #allocation1 [shape = 'u32[144,128]{1,0:T(1,128)}', space=vmem, size = 0x12000, scoped, tag = 'internal scratch']
  %s0 = inlined_call_operand.vmem [shape: f32[2,1024], index: 0, kind: input, shape index: {}]
  %s1 = inlined_call_operand.vmem [shape: bf16[1024,32], index: 1, kind: input, shape index: {}]
  %s2 = inlined_call_operand.vmem [shape: f32[1,32], index: 2, kind: input, shape index: {}]
  %s3 = inlined_call_operand.hbm [shape: f32[2,32], index: 3, kind: output, shape index: {0}]
  %s4 = inlined_call_operand.hbm [shape: f32[2,32], index: 4, kind: output, shape index: {1}]
  %s5 = inlined_call_operand.vmem [shape: f32[2,1], index: 5, kind: output, shape index: {2}]
  %6 = xla_tuple %s3, %s4, %s5
  %s7 = sld [smem:[#allocation0]]
  $region38: #{inner_model_forward.1} parent=0
    _
  %s9 = ssub.s32 1, %s7
  %s10 = scalar_select 0, %s9, %s7
  $region1: #{inner_model_forward.1} parent=0
    #allocation2 [shape = 'u8[1024]{0}', space=vmem, size = 0x400, scoped, tag = 'output window, operand 0, single buffered']
    #allocation3 [shape = 's32[1]{0}', space=sflag, size = 0x4, scoped, tag = 'scoped memory for inner_model_forward.1']
    #allocation4 [shape = 'u8[1024]{0}', space=vmem, size = 0x400, scoped, tag = 'output window, operand 1, single buffered']
    #allocation5 [shape = 's32[1]{0}', space=sflag, size = 0x4, scoped, tag = 'scoped memory for inner_model_forward.1']
    %11 = vsyncpa [#allocation3], 0
    %12 = vsyncpa [#allocation5], 0
    // Predicated region
    $region2: #{inner_model_forward.1} parent=1 // pred_check
      _
    $region3: #{inner_model_forward.1} parent=1 // pred_check_branch
      %14 = sbr.rel (0) target = $region5
    $region4: #{inner_model_forward.1} parent=1 // pred_region
      _
    $region5: #{inner_model_forward.1} parent=1 // pred_fallthru
      _
    // Predicated region
    $region6: #{inner_model_forward.1} parent=1 // pred_check
      _
    $region7: #{inner_model_forward.1} parent=1 // pred_check_branch
      %16 = sbr.rel (0) target = $region9
    $region8: #{inner_model_forward.1} parent=1 // pred_region
      _
    $region9: #{inner_model_forward.1} parent=1 // pred_fallthru
      _
    // Predicated region
    $region10: #{inner_model_forward.1} parent=1 // pred_check
      _
    $region11: #{inner_model_forward.1} parent=1 // pred_check_branch
      %18 = sbr.rel (0) target = $region13
    $region12: #{inner_model_forward.1} parent=1 // pred_region
      _
    $region13: #{inner_model_forward.1} parent=1 // pred_fallthru
      _
    %v20 = vld [vmem:[%s0] sm:$0xff]
    %v21 = vld [vmem:[%s0 + $0x8] sm:$0xff]
    %v24 = vcombine.high %v20, %v20
    %v26 = vunpack.c.l.s4 1983009808
    %v27 = vunpack.c.0.s8 %v26
    %v28 = vlaneseq
    %v29 = vshrl.u32 %v28, 7
    %v30 = vsub.s32 %v27, %v29
    %v31 = vrot.slane %v20, %v30
    %v33 = vunpack.c.l.s4 1983009808
    %v34 = vunpack.c.0.s8 %v33
    %v35 = vlaneseq
    %v36 = vshrl.u32 %v35, 7
    %v37 = vsub.s32 %v34, %v36
    %v38 = vrot.slane %v24, %v37
    %v39 = vcombine.high %v31, %v31
    %v40 = vcombine.high %v38, %v38
    %v41 = vcombine.high %v21, %v21
    %v43 = vunpack.c.l.s4 1983009808
    %v44 = vunpack.c.0.s8 %v43
    %v45 = vlaneseq
    %v46 = vshrl.u32 %v45, 7
    %v47 = vsub.s32 %v44, %v46
    %v48 = vrot.slane %v21, %v47
    %v50 = vunpack.c.l.s4 1983009808
    %v51 = vunpack.c.0.s8 %v50
    %v52 = vlaneseq
    %v53 = vshrl.u32 %v52, 7
    %v54 = vsub.s32 %v51, %v53
    %v55 = vrot.slane %v41, %v54
    %v56 = vcombine.high %v48, %v48
    %v57 = vcombine.high %v55, %v55
    %v66 = vpack.c.bf16 %v31, %v31
    %v67 = vpack.c.bf16 %v39, %v39
    %v68 = vpack.c.bf16 %v38, %v38
    %v69 = vpack.c.bf16 %v40, %v40
    %v70 = vpack.c.bf16 %v48, %v48
    %v71 = vpack.c.bf16 %v56, %v56
    %v72 = vpack.c.bf16 %v55, %v55
    %v73 = vpack.c.bf16 %v57, %v57
    %v74 = vld [vmem:[%s1] sm:$0xf]
    %v75 = vld [vmem:[%s1 + $0x4] sm:$0xf]
    %v76 = vld [vmem:[%s1 + $0x8] sm:$0xf]
    %v77 = vld [vmem:[%s1 + $0xc] sm:$0xf]
    %v78 = vld [vmem:[%s1 + $0x10] sm:$0xf]
    %v79 = vld [vmem:[%s1 + $0x14] sm:$0xf]
    %v80 = vld [vmem:[%s1 + $0x18] sm:$0xf]
    %v81 = vld [vmem:[%s1 + $0x1c] sm:$0xf]
    %v82 = vld [vmem:[%s1 + $0x20] sm:$0xf]
    %v83 = vld [vmem:[%s1 + $0x24] sm:$0xf]
    %v84 = vld [vmem:[%s1 + $0x28] sm:$0xf]
    %v85 = vld [vmem:[%s1 + $0x2c] sm:$0xf]
    %v86 = vld [vmem:[%s1 + $0x30] sm:$0xf]
    %v87 = vld [vmem:[%s1 + $0x34] sm:$0xf]
    %v88 = vld [vmem:[%s1 + $0x38] sm:$0xf]
    %v89 = vld [vmem:[%s1 + $0x3c] sm:$0xf]
    %v90 = vld [vmem:[%s1 + $0x40] sm:$0xf]
    %v91 = vld [vmem:[%s1 + $0x44] sm:$0xf]
    %v92 = vld [vmem:[%s1 + $0x48] sm:$0xf]
    %v93 = vld [vmem:[%s1 + $0x4c] sm:$0xf]
    %v94 = vld [vmem:[%s1 + $0x50] sm:$0xf]
    %v95 = vld [vmem:[%s1 + $0x54] sm:$0xf]
    %v96 = vld [vmem:[%s1 + $0x58] sm:$0xf]
    %v97 = vld [vmem:[%s1 + $0x5c] sm:$0xf]
    %v98 = vld [vmem:[%s1 + $0x60] sm:$0xf]
    %v99 = vld [vmem:[%s1 + $0x64] sm:$0xf]
    %v100 = vld [vmem:[%s1 + $0x68] sm:$0xf]
    %v101 = vld [vmem:[%s1 + $0x6c] sm:$0xf]
    %v102 = vld [vmem:[%s1 + $0x70] sm:$0xf]
    %v103 = vld [vmem:[%s1 + $0x74] sm:$0xf]
    %v104 = vld [vmem:[%s1 + $0x78] sm:$0xf]
    %v105 = vld [vmem:[%s1 + $0x7c] sm:$0xf]
    %v106 = vld [vmem:[%s1 + $0x80] sm:$0xf]
    %v107 = vld [vmem:[%s1 + $0x84] sm:$0xf]
    %v108 = vld [vmem:[%s1 + $0x88] sm:$0xf]
    %v109 = vld [vmem:[%s1 + $0x8c] sm:$0xf]
    %v110 = vld [vmem:[%s1 + $0x90] sm:$0xf]
    %v111 = vld [vmem:[%s1 + $0x94] sm:$0xf]
    %v112 = vld [vmem:[%s1 + $0x98] sm:$0xf]
    %v113 = vld [vmem:[%s1 + $0x9c] sm:$0xf]
    %v114 = vld [vmem:[%s1 + $0xa0] sm:$0xf]
    %v115 = vld [vmem:[%s1 + $0xa4] sm:$0xf]
    %v116 = vld [vmem:[%s1 + $0xa8] sm:$0xf]
    %v117 = vld [vmem:[%s1 + $0xac] sm:$0xf]
    %v118 = vld [vmem:[%s1 + $0xb0] sm:$0xf]
    %v119 = vld [vmem:[%s1 + $0xb4] sm:$0xf]
    %v120 = vld [vmem:[%s1 + $0xb8] sm:$0xf]
    %v121 = vld [vmem:[%s1 + $0xbc] sm:$0xf]
    %v122 = vld [vmem:[%s1 + $0xc0] sm:$0xf]
    %v123 = vld [vmem:[%s1 + $0xc4] sm:$0xf]
    %v124 = vld [vmem:[%s1 + $0xc8] sm:$0xf]
    %v125 = vld [vmem:[%s1 + $0xcc] sm:$0xf]
    %v126 = vld [vmem:[%s1 + $0xd0] sm:$0xf]
    %v127 = vld [vmem:[%s1 + $0xd4] sm:$0xf]
    %v128 = vld [vmem:[%s1 + $0xd8] sm:$0xf]
    %v129 = vld [vmem:[%s1 + $0xdc] sm:$0xf]
    %v130 = vld [vmem:[%s1 + $0xe0] sm:$0xf]
    %v131 = vld [vmem:[%s1 + $0xe4] sm:$0xf]
    %v132 = vld [vmem:[%s1 + $0xe8] sm:$0xf]
    %v133 = vld [vmem:[%s1 + $0xec] sm:$0xf]
    %v134 = vld [vmem:[%s1 + $0xf0] sm:$0xf]
    %v135 = vld [vmem:[%s1 + $0xf4] sm:$0xf]
    %v136 = vld [vmem:[%s1 + $0xf8] sm:$0xf]
    %v137 = vld [vmem:[%s1 + $0xfc] sm:$0xf]
    %v138 = vld [vmem:[%s1 + $0x100] sm:$0xf]
    %v139 = vld [vmem:[%s1 + $0x104] sm:$0xf]
    %v140 = vld [vmem:[%s1 + $0x108] sm:$0xf]
    %v141 = vld [vmem:[%s1 + $0x10c] sm:$0xf]
    %v142 = vld [vmem:[%s1 + $0x110] sm:$0xf]
    %v143 = vld [vmem:[%s1 + $0x114] sm:$0xf]
    %v144 = vld [vmem:[%s1 + $0x118] sm:$0xf]
    %v145 = vld [vmem:[%s1 + $0x11c] sm:$0xf]
    %v146 = vld [vmem:[%s1 + $0x120] sm:$0xf]
    %v147 = vld [vmem:[%s1 + $0x124] sm:$0xf]
    %v148 = vld [vmem:[%s1 + $0x128] sm:$0xf]
    %v149 = vld [vmem:[%s1 + $0x12c] sm:$0xf]
    %v150 = vld [vmem:[%s1 + $0x130] sm:$0xf]
    %v151 = vld [vmem:[%s1 + $0x134] sm:$0xf]
    %v152 = vld [vmem:[%s1 + $0x138] sm:$0xf]
    %v153 = vld [vmem:[%s1 + $0x13c] sm:$0xf]
    %v154 = vld [vmem:[%s1 + $0x140] sm:$0xf]
    %v155 = vld [vmem:[%s1 + $0x144] sm:$0xf]
    %v156 = vld [vmem:[%s1 + $0x148] sm:$0xf]
    %v157 = vld [vmem:[%s1 + $0x14c] sm:$0xf]
    %v158 = vld [vmem:[%s1 + $0x150] sm:$0xf]
    %v159 = vld [vmem:[%s1 + $0x154] sm:$0xf]
    %v160 = vld [vmem:[%s1 + $0x158] sm:$0xf]
    %v161 = vld [vmem:[%s1 + $0x15c] sm:$0xf]
    %v162 = vld [vmem:[%s1 + $0x160] sm:$0xf]
    %v163 = vld [vmem:[%s1 + $0x164] sm:$0xf]
    %v164 = vld [vmem:[%s1 + $0x168] sm:$0xf]
    %v165 = vld [vmem:[%s1 + $0x16c] sm:$0xf]
    %v166 = vld [vmem:[%s1 + $0x170] sm:$0xf]
    %v167 = vld [vmem:[%s1 + $0x174] sm:$0xf]
    %v168 = vld [vmem:[%s1 + $0x178] sm:$0xf]
    %v169 = vld [vmem:[%s1 + $0x17c] sm:$0xf]
    %v170 = vld [vmem:[%s1 + $0x180] sm:$0xf]
    %v171 = vld [vmem:[%s1 + $0x184] sm:$0xf]
    %v172 = vld [vmem:[%s1 + $0x188] sm:$0xf]
    %v173 = vld [vmem:[%s1 + $0x18c] sm:$0xf]
    %v174 = vld [vmem:[%s1 + $0x190] sm:$0xf]
    %v175 = vld [vmem:[%s1 + $0x194] sm:$0xf]
    %v176 = vld [vmem:[%s1 + $0x198] sm:$0xf]
    %v177 = vld [vmem:[%s1 + $0x19c] sm:$0xf]
    %v178 = vld [vmem:[%s1 + $0x1a0] sm:$0xf]
    %v179 = vld [vmem:[%s1 + $0x1a4] sm:$0xf]
    %v180 = vld [vmem:[%s1 + $0x1a8] sm:$0xf]
    %v181 = vld [vmem:[%s1 + $0x1ac] sm:$0xf]
    %v182 = vld [vmem:[%s1 + $0x1b0] sm:$0xf]
    %v183 = vld [vmem:[%s1 + $0x1b4] sm:$0xf]
    %v184 = vld [vmem:[%s1 + $0x1b8] sm:$0xf]
    %v185 = vld [vmem:[%s1 + $0x1bc] sm:$0xf]
    %v186 = vld [vmem:[%s1 + $0x1c0] sm:$0xf]
    %v187 = vld [vmem:[%s1 + $0x1c4] sm:$0xf]
    %v188 = vld [vmem:[%s1 + $0x1c8] sm:$0xf]
    %v189 = vld [vmem:[%s1 + $0x1cc] sm:$0xf]
    %v190 = vld [vmem:[%s1 + $0x1d0] sm:$0xf]
    %v191 = vld [vmem:[%s1 + $0x1d4] sm:$0xf]
    %v192 = vld [vmem:[%s1 + $0x1d8] sm:$0xf]
    %v193 = vld [vmem:[%s1 + $0x1dc] sm:$0xf]
    %v194 = vld [vmem:[%s1 + $0x1e0] sm:$0xf]
    %v195 = vld [vmem:[%s1 + $0x1e4] sm:$0xf]
    %v196 = vld [vmem:[%s1 + $0x1e8] sm:$0xf]
    %v197 = vld [vmem:[%s1 + $0x1ec] sm:$0xf]
    %v198 = vld [vmem:[%s1 + $0x1f0] sm:$0xf]
    %v199 = vld [vmem:[%s1 + $0x1f4] sm:$0xf]
    %v200 = vld [vmem:[%s1 + $0x1f8] sm:$0xf]
    %v201 = vld [vmem:[%s1 + $0x1fc] sm:$0xf]
    %v202 = vld [vmem:[%s2] sm:$0x1]
    %v204 = vlaneseq
    %v205 = vshrl.u32 %v204, 7
    %v206 = vsub.s32 0, %v205
    %v207 = vrot.slane %v202, %v206
    %v337 = vunpack.c.l.b16 %v74
    %v338 = vunpack.c.l.b16 %v75
    %v339 = vunpack.c.l.b16 %v76
    %v340 = vunpack.c.l.b16 %v77
    %v341 = vunpack.c.l.b16 %v78
    %v342 = vunpack.c.l.b16 %v79
    %v343 = vunpack.c.l.b16 %v80
    %v344 = vunpack.c.l.b16 %v81
    %v345 = vunpack.c.l.b16 %v82
    %v346 = vunpack.c.l.b16 %v83
    %v347 = vunpack.c.l.b16 %v84
    %v348 = vunpack.c.l.b16 %v85
    %v349 = vunpack.c.l.b16 %v86
    %v350 = vunpack.c.l.b16 %v87
    %v351 = vunpack.c.l.b16 %v88
    %v352 = vunpack.c.l.b16 %v89
    %v353 = vunpack.c.l.b16 %v90
    %v354 = vunpack.c.l.b16 %v91
    %v355 = vunpack.c.l.b16 %v92
    %v356 = vunpack.c.l.b16 %v93
    %v357 = vunpack.c.l.b16 %v94
    %v358 = vunpack.c.l.b16 %v95
    %v359 = vunpack.c.l.b16 %v96
    %v360 = vunpack.c.l.b16 %v97
    %v361 = vunpack.c.l.b16 %v98
    %v362 = vunpack.c.l.b16 %v99
    %v363 = vunpack.c.l.b16 %v100
    %v364 = vunpack.c.l.b16 %v101
    %v365 = vunpack.c.l.b16 %v102
    %v366 = vunpack.c.l.b16 %v103
    %v367 = vunpack.c.l.b16 %v104
    %v368 = vunpack.c.l.b16 %v105
    %v369 = vunpack.c.l.b16 %v106
    %v370 = vunpack.c.l.b16 %v107
    %v371 = vunpack.c.l.b16 %v108
    %v372 = vunpack.c.l.b16 %v109
    %v373 = vunpack.c.l.b16 %v110
    %v374 = vunpack.c.l.b16 %v111
    %v375 = vunpack.c.l.b16 %v112
    %v376 = vunpack.c.l.b16 %v113
    %v377 = vunpack.c.l.b16 %v114
    %v378 = vunpack.c.l.b16 %v115
    %v379 = vunpack.c.l.b16 %v116
    %v380 = vunpack.c.l.b16 %v117
    %v381 = vunpack.c.l.b16 %v118
    %v382 = vunpack.c.l.b16 %v119
    %v383 = vunpack.c.l.b16 %v120
    %v384 = vunpack.c.l.b16 %v121
    %v385 = vunpack.c.l.b16 %v122
    %v386 = vunpack.c.l.b16 %v123
    %v387 = vunpack.c.l.b16 %v124
    %v388 = vunpack.c.l.b16 %v125
    %v389 = vunpack.c.l.b16 %v126
    %v390 = vunpack.c.l.b16 %v127
    %v391 = vunpack.c.l.b16 %v128
    %v392 = vunpack.c.l.b16 %v129
    %v393 = vunpack.c.l.b16 %v130
    %v394 = vunpack.c.l.b16 %v131
    %v395 = vunpack.c.l.b16 %v132
    %v396 = vunpack.c.l.b16 %v133
    %v397 = vunpack.c.l.b16 %v134
    %v398 = vunpack.c.l.b16 %v135
    %v399 = vunpack.c.l.b16 %v136
    %v400 = vunpack.c.l.b16 %v137
    %v401 = vunpack.c.l.b16 %v138
    %v402 = vunpack.c.l.b16 %v139
    %v403 = vunpack.c.l.b16 %v140
    %v404 = vunpack.c.l.b16 %v141
    %v405 = vunpack.c.l.b16 %v142
    %v406 = vunpack.c.l.b16 %v143
    %v407 = vunpack.c.l.b16 %v144
    %v408 = vunpack.c.l.b16 %v145
    %v409 = vunpack.c.l.b16 %v146
    %v410 = vunpack.c.l.b16 %v147
    %v411 = vunpack.c.l.b16 %v148
    %v412 = vunpack.c.l.b16 %v149
    %v413 = vunpack.c.l.b16 %v150
    %v414 = vunpack.c.l.b16 %v151
    %v415 = vunpack.c.l.b16 %v152
    %v416 = vunpack.c.l.b16 %v153
    %v417 = vunpack.c.l.b16 %v154
    %v418 = vunpack.c.l.b16 %v155
    %v419 = vunpack.c.l.b16 %v156
    %v420 = vunpack.c.l.b16 %v157
    %v421 = vunpack.c.l.b16 %v158
    %v422 = vunpack.c.l.b16 %v159
    %v423 = vunpack.c.l.b16 %v160
    %v424 = vunpack.c.l.b16 %v161
    %v425 = vunpack.c.l.b16 %v162
    %v426 = vunpack.c.l.b16 %v163
    %v427 = vunpack.c.l.b16 %v164
    %v428 = vunpack.c.l.b16 %v165
    %v429 = vunpack.c.l.b16 %v166
    %v430 = vunpack.c.l.b16 %v167
    %v431 = vunpack.c.l.b16 %v168
    %v432 = vunpack.c.l.b16 %v169
    %v433 = vunpack.c.l.b16 %v170
    %v434 = vunpack.c.l.b16 %v171
    %v435 = vunpack.c.l.b16 %v172
    %v436 = vunpack.c.l.b16 %v173
    %v437 = vunpack.c.l.b16 %v174
    %v438 = vunpack.c.l.b16 %v175
    %v439 = vunpack.c.l.b16 %v176
    %v440 = vunpack.c.l.b16 %v177
    %v441 = vunpack.c.l.b16 %v178
    %v442 = vunpack.c.l.b16 %v179
    %v443 = vunpack.c.l.b16 %v180
    %v444 = vunpack.c.l.b16 %v181
    %v445 = vunpack.c.l.b16 %v182
    %v446 = vunpack.c.l.b16 %v183
    %v447 = vunpack.c.l.b16 %v184
    %v448 = vunpack.c.l.b16 %v185
    %v449 = vunpack.c.l.b16 %v186
    %v450 = vunpack.c.l.b16 %v187
    %v451 = vunpack.c.l.b16 %v188
    %v452 = vunpack.c.l.b16 %v189
    %v453 = vunpack.c.l.b16 %v190
    %v454 = vunpack.c.l.b16 %v191
    %v455 = vunpack.c.l.b16 %v192
    %v456 = vunpack.c.l.b16 %v193
    %v457 = vunpack.c.l.b16 %v194
    %v458 = vunpack.c.l.b16 %v195
    %v459 = vunpack.c.l.b16 %v196
    %v460 = vunpack.c.l.b16 %v197
    %v461 = vunpack.c.l.b16 %v198
    %v462 = vunpack.c.l.b16 %v199
    %v463 = vunpack.c.l.b16 %v200
    %v464 = vunpack.c.l.b16 %v201
    %v465 = vpack.c.b16 %v338, %v337
    %v466 = vpack.c.b16 %v340, %v339
    %v467 = vpack.c.b16 %v342, %v341
    %v468 = vpack.c.b16 %v344, %v343
    %v469 = vpack.c.b16 %v346, %v345
    %v470 = vpack.c.b16 %v348, %v347
    %v471 = vpack.c.b16 %v350, %v349
    %v472 = vpack.c.b16 %v352, %v351
    %v473 = vpack.c.b16 %v354, %v353
    %v474 = vpack.c.b16 %v356, %v355
    %v475 = vpack.c.b16 %v358, %v357
    %v476 = vpack.c.b16 %v360, %v359
    %v477 = vpack.c.b16 %v362, %v361
    %v478 = vpack.c.b16 %v364, %v363
    %v479 = vpack.c.b16 %v366, %v365
    %v480 = vpack.c.b16 %v368, %v367
    %v481 = vpack.c.b16 %v370, %v369
    %v482 = vpack.c.b16 %v372, %v371
    %v483 = vpack.c.b16 %v374, %v373
    %v484 = vpack.c.b16 %v376, %v375
    %v485 = vpack.c.b16 %v378, %v377
    %v486 = vpack.c.b16 %v380, %v379
    %v487 = vpack.c.b16 %v382, %v381
    %v488 = vpack.c.b16 %v384, %v383
    %v489 = vpack.c.b16 %v386, %v385
    %v490 = vpack.c.b16 %v388, %v387
    %v491 = vpack.c.b16 %v390, %v389
    %v492 = vpack.c.b16 %v392, %v391
    %v493 = vpack.c.b16 %v394, %v393
    %v494 = vpack.c.b16 %v396, %v395
    %v495 = vpack.c.b16 %v398, %v397
    %v496 = vpack.c.b16 %v400, %v399
    %v497 = vpack.c.b16 %v402, %v401
    %v498 = vpack.c.b16 %v404, %v403
    %v499 = vpack.c.b16 %v406, %v405
    %v500 = vpack.c.b16 %v408, %v407
    %v501 = vpack.c.b16 %v410, %v409
    %v502 = vpack.c.b16 %v412, %v411
    %v503 = vpack.c.b16 %v414, %v413
    %v504 = vpack.c.b16 %v416, %v415
    %v505 = vpack.c.b16 %v418, %v417
    %v506 = vpack.c.b16 %v420, %v419
    %v507 = vpack.c.b16 %v422, %v421
    %v508 = vpack.c.b16 %v424, %v423
    %v509 = vpack.c.b16 %v426, %v425
    %v510 = vpack.c.b16 %v428, %v427
    %v511 = vpack.c.b16 %v430, %v429
    %v512 = vpack.c.b16 %v432, %v431
    %v513 = vpack.c.b16 %v434, %v433
    %v514 = vpack.c.b16 %v436, %v435
    %v515 = vpack.c.b16 %v438, %v437
    %v516 = vpack.c.b16 %v440, %v439
    %v517 = vpack.c.b16 %v442, %v441
    %v518 = vpack.c.b16 %v444, %v443
    %v519 = vpack.c.b16 %v446, %v445
    %v520 = vpack.c.b16 %v448, %v447
    %v521 = vpack.c.b16 %v450, %v449
    %v522 = vpack.c.b16 %v452, %v451
    %v523 = vpack.c.b16 %v454, %v453
    %v524 = vpack.c.b16 %v456, %v455
    %v525 = vpack.c.b16 %v458, %v457
    %v526 = vpack.c.b16 %v460, %v459
    %v527 = vpack.c.b16 %v462, %v461
    %v528 = vpack.c.b16 %v464, %v463
    %593 = vmatprep.subr.bf16.mxu0 0
    %594 = vmatpush1.bf16.msra.mxu0 %v465
    %595 = vmatprep.subr.bf16.mxu0 0
    %596 = vmatpush1.bf16.msra.mxu0 %v466
    %597 = vmatprep.subr.bf16.mxu0 0
    %598 = vmatpush1.bf16.msra.mxu0 %v467
    %599 = vmatprep.subr.bf16.mxu0 0
    %600 = vmatpush1.bf16.msra.mxu0 %v468
    %601 = vmatprep.subr.bf16.mxu0 0
    %602 = vmatpush1.bf16.msra.mxu0 %v469
    %603 = vmatprep.subr.bf16.mxu0 0
    %604 = vmatpush1.bf16.msra.mxu0 %v470
    %605 = vmatprep.subr.bf16.mxu0 0
    %606 = vmatpush1.bf16.msra.mxu0 %v471
    %607 = vmatprep.subr.bf16.mxu0 0
    %608 = vmatpush1.bf16.msra.mxu0 %v472
    %609 = vmatprep.subr.bf16.mxu0 0
    %610 = vmatpush1.bf16.msra.mxu0 %v473
    %611 = vmatprep.subr.bf16.mxu0 0
    %612 = vmatpush1.bf16.msra.mxu0 %v474
    %613 = vmatprep.subr.bf16.mxu0 0
    %614 = vmatpush1.bf16.msra.mxu0 %v475
    %615 = vmatprep.subr.bf16.mxu0 0
    %616 = vmatpush1.bf16.msra.mxu0 %v476
    %617 = vmatprep.subr.bf16.mxu0 0
    %618 = vmatpush1.bf16.msra.mxu0 %v477
    %619 = vmatprep.subr.bf16.mxu0 0
    %620 = vmatpush1.bf16.msra.mxu0 %v478
    %621 = vmatprep.subr.bf16.mxu0 0
    %622 = vmatpush1.bf16.msra.mxu0 %v479
    %623 = vmatprep.subr.bf16.mxu0 0
    %624 = vmatpush1.bf16.msra.mxu0 %v480
    %625 = vmatprep.mubr.bf16.mxu0 %v67
    %626 = vmatmul.mubr.bf16.gmra.mrb[0].mxu0 %v66
    %v627 = vpop.f32.mrb[0].mxu0
    %v628 = vadd.f32 %v207, %v627
    %v629 = vpop.f32.mrb[0].mxu0
    %v630 = vpop.f32.mrb[0].mxu0
    %v631 = vpop.f32.mrb[0].mxu0
    %632 = vdwg.mxu0
    %633 = vmatprep.subr.bf16.mxu0 0
    %634 = vmatpush1.bf16.msra.mxu0 %v481
    %635 = vmatprep.subr.bf16.mxu0 0
    %636 = vmatpush1.bf16.msra.mxu0 %v482
    %637 = vmatprep.subr.bf16.mxu0 0
    %638 = vmatpush1.bf16.msra.mxu0 %v483
    %639 = vmatprep.subr.bf16.mxu0 0
    %640 = vmatpush1.bf16.msra.mxu0 %v484
    %641 = vmatprep.subr.bf16.mxu0 0
    %642 = vmatpush1.bf16.msra.mxu0 %v485
    %643 = vmatprep.subr.bf16.mxu0 0
    %644 = vmatpush1.bf16.msra.mxu0 %v486
    %645 = vmatprep.subr.bf16.mxu0 0
    %646 = vmatpush1.bf16.msra.mxu0 %v487
    %647 = vmatprep.subr.bf16.mxu0 0
    %648 = vmatpush1.bf16.msra.mxu0 %v488
    %649 = vmatprep.subr.bf16.mxu0 0
    %650 = vmatpush1.bf16.msra.mxu0 %v489
    %651 = vmatprep.subr.bf16.mxu0 0
    %652 = vmatpush1.bf16.msra.mxu0 %v490
    %653 = vmatprep.subr.bf16.mxu0 0
    %654 = vmatpush1.bf16.msra.mxu0 %v491
    %655 = vmatprep.subr.bf16.mxu0 0
    %656 = vmatpush1.bf16.msra.mxu0 %v492
    %657 = vmatprep.subr.bf16.mxu0 0
    %658 = vmatpush1.bf16.msra.mxu0 %v493
    %659 = vmatprep.subr.bf16.mxu0 0
    %660 = vmatpush1.bf16.msra.mxu0 %v494
    %661 = vmatprep.subr.bf16.mxu0 0
    %662 = vmatpush1.bf16.msra.mxu0 %v495
    %663 = vmatprep.subr.bf16.mxu0 0
    %664 = vmatpush1.bf16.msra.mxu0 %v496
    %665 = vmatprep.mubr.bf16.mxu0 %v69
    %666 = vmatmul.mubr.bf16.gmra.mrb[0].mxu0 %v68
    %v667 = vpop.f32.mrb[0].mxu0
    %v668 = vadd.f32 %v628, %v667
    %v669 = vpop.f32.mrb[0].mxu0
    %v670 = vpop.f32.mrb[0].mxu0
    %v671 = vpop.f32.mrb[0].mxu0
    %672 = vdwg.mxu0
    %673 = vmatprep.subr.bf16.mxu0 0
    %674 = vmatpush1.bf16.msra.mxu0 %v497
    %675 = vmatprep.subr.bf16.mxu0 0
    %676 = vmatpush1.bf16.msra.mxu0 %v498
    %677 = vmatprep.subr.bf16.mxu0 0
    %678 = vmatpush1.bf16.msra.mxu0 %v499
    %679 = vmatprep.subr.bf16.mxu0 0
    %680 = vmatpush1.bf16.msra.mxu0 %v500
    %681 = vmatprep.subr.bf16.mxu0 0
    %682 = vmatpush1.bf16.msra.mxu0 %v501
    %683 = vmatprep.subr.bf16.mxu0 0
    %684 = vmatpush1.bf16.msra.mxu0 %v502
    %685 = vmatprep.subr.bf16.mxu0 0
    %686 = vmatpush1.bf16.msra.mxu0 %v503
    %687 = vmatprep.subr.bf16.mxu0 0
    %688 = vmatpush1.bf16.msra.mxu0 %v504
    %689 = vmatprep.subr.bf16.mxu0 0
    %690 = vmatpush1.bf16.msra.mxu0 %v505
    %691 = vmatprep.subr.bf16.mxu0 0
    %692 = vmatpush1.bf16.msra.mxu0 %v506
    %693 = vmatprep.subr.bf16.mxu0 0
    %694 = vmatpush1.bf16.msra.mxu0 %v507
    %695 = vmatprep.subr.bf16.mxu0 0
    %696 = vmatpush1.bf16.msra.mxu0 %v508
    %697 = vmatprep.subr.bf16.mxu0 0
    %698 = vmatpush1.bf16.msra.mxu0 %v509
    %699 = vmatprep.subr.bf16.mxu0 0
    %700 = vmatpush1.bf16.msra.mxu0 %v510
    %701 = vmatprep.subr.bf16.mxu0 0
    %702 = vmatpush1.bf16.msra.mxu0 %v511
    %703 = vmatprep.subr.bf16.mxu0 0
    %704 = vmatpush1.bf16.msra.mxu0 %v512
    %705 = vmatprep.mubr.bf16.mxu0 %v71
    %706 = vmatmul.mubr.bf16.gmra.mrb[0].mxu0 %v70
    %v707 = vpop.f32.mrb[0].mxu0
    %v708 = vadd.f32 %v668, %v707
    %v709 = vpop.f32.mrb[0].mxu0
    %v710 = vpop.f32.mrb[0].mxu0
    %v711 = vpop.f32.mrb[0].mxu0
    %712 = vdwg.mxu0
    %713 = vmatprep.subr.bf16.mxu0 0
    %714 = vmatpush1.bf16.msra.mxu0 %v513
    %715 = vmatprep.subr.bf16.mxu0 0
    %716 = vmatpush1.bf16.msra.mxu0 %v514
    %717 = vmatprep.subr.bf16.mxu0 0
    %718 = vmatpush1.bf16.msra.mxu0 %v515
    %719 = vmatprep.subr.bf16.mxu0 0
    %720 = vmatpush1.bf16.msra.mxu0 %v516
    %721 = vmatprep.subr.bf16.mxu0 0
    %722 = vmatpush1.bf16.msra.mxu0 %v517
    %723 = vmatprep.subr.bf16.mxu0 0
    %724 = vmatpush1.bf16.msra.mxu0 %v518
    %725 = vmatprep.subr.bf16.mxu0 0
    %726 = vmatpush1.bf16.msra.mxu0 %v519
    %727 = vmatprep.subr.bf16.mxu0 0
    %728 = vmatpush1.bf16.msra.mxu0 %v520
    %729 = vmatprep.subr.bf16.mxu0 0
    %730 = vmatpush1.bf16.msra.mxu0 %v521
    %731 = vmatprep.subr.bf16.mxu0 0
    %732 = vmatpush1.bf16.msra.mxu0 %v522
    %733 = vmatprep.subr.bf16.mxu0 0
    %734 = vmatpush1.bf16.msra.mxu0 %v523
    %735 = vmatprep.subr.bf16.mxu0 0
    %736 = vmatpush1.bf16.msra.mxu0 %v524
    %737 = vmatprep.subr.bf16.mxu0 0
    %738 = vmatpush1.bf16.msra.mxu0 %v525
    %739 = vmatprep.subr.bf16.mxu0 0
    %740 = vmatpush1.bf16.msra.mxu0 %v526
    %741 = vmatprep.subr.bf16.mxu0 0
    %742 = vmatpush1.bf16.msra.mxu0 %v527
    %743 = vmatprep.subr.bf16.mxu0 0
    %744 = vmatpush1.bf16.msra.mxu0 %v528
    %745 = vmatprep.mubr.bf16.mxu0 %v73
    %746 = vmatmul.mubr.bf16.gmra.mrb[0].mxu0 %v72
    %v747 = vpop.f32.mrb[0].mxu0
    %v748 = vadd.f32 %v708, %v747
    %v749 = vpop.f32.mrb[0].mxu0
    %v750 = vpop.f32.mrb[0].mxu0
    %v751 = vpop.f32.mrb[0].mxu0
    %752 = vdwg.mxu0
    %vm753 = vcmask 254976
    %754 = vst.msk [vmem:[#allocation2] sm:$0x3] %vm753, %v748
    %v755 = vmax.f32 %v748, 0.0
    %756 = vst.msk [vmem:[#allocation4] sm:$0x3] %vm753, %v755
    %vm757 = vcmask 1041408
    %v758 = vsel %vm757, %v31, 0.0
    %v759 = vsel %vm757, %v39, 0.0
    %v760 = vadd.f32 %v758, %v759
    %v761 = vsel %vm757, %v38, 0.0
    %v762 = vadd.f32 %v760, %v761
    %v763 = vsel %vm757, %v40, 0.0
    %v764 = vadd.f32 %v762, %v763
    %v765 = vsel %vm757, %v48, 0.0
    %v766 = vadd.f32 %v764, %v765
    %v767 = vsel %vm757, %v56, 0.0
    %v768 = vadd.f32 %v766, %v767
    %v769 = vsel %vm757, %v55, 0.0
    %v770 = vadd.f32 %v768, %v769
    %v771 = vsel %vm757, %v57, 0.0
    %v772 = vadd.f32 %v770, %v771
    %773 = vadd.xlane.f32.xlu0 %v772
    %v774 = vpop.xlane.xlu0 %773
    %v775 = vrcp.pop 1024.0
    %v776 = vmul.f32 %v774, %v775
    %vm777 = vcmask 1024
    %778 = vst.msk [vmem:[%s5] sm:$0x3] %vm777, %v776
    // Predicated region
    $region14: #{inner_model_forward.1} parent=1 // pred_check
      _
    $region15: #{inner_model_forward.1} parent=1 // pred_check_branch
      %780 = sbr.rel (0) target = $region17
    $region16: #{inner_model_forward.1} parent=1 // pred_region
      %s782 = ssub.s32 32, 32
      %783 = vsyncadd [#allocation3], %s782
      %s785 = sshll.u32 [#allocation2], 4
      %s786 = int_to_ptr.vmem [resolvable:$true] %s785
      %788 = dma.vmem_to_hbm [thread:$0]  %s786, 32, %s3, [#allocation3]
    $region17: #{inner_model_forward.1} parent=1 // pred_fallthru
      _
    // Predicated region
    $region18: #{inner_model_forward.1} parent=1 // pred_check
      _
    $region19: #{inner_model_forward.1} parent=1 // pred_check_branch
      %790 = sbr.rel (0) target = $region21
    $region20: #{inner_model_forward.1} parent=1 // pred_region
      %s792 = ssub.s32 32, 32
      %793 = vsyncadd [#allocation5], %s792
      %s795 = sshll.u32 [#allocation4], 4
      %s796 = int_to_ptr.vmem [resolvable:$true] %s795
      %798 = dma.vmem_to_hbm [thread:$0]  %s796, 32, %s4, [#allocation5]
    $region21: #{inner_model_forward.1} parent=1 // pred_fallthru
      _
    // Predicated region
    $region22: #{inner_model_forward.1} parent=1 // pred_check
      _
    $region23: #{inner_model_forward.1} parent=1 // pred_check_branch
      %800 = sbr.rel (0) target = $region25
    $region24: #{inner_model_forward.1} parent=1 // pred_region
      _
    $region25: #{inner_model_forward.1} parent=1 // pred_fallthru
      _
    // Predicated region
    $region26: #{inner_model_forward.1} parent=1 // pred_check
      _
    $region27: #{inner_model_forward.1} parent=1 // pred_check_branch
      %802 = sbr.rel (0) target = $region29
    $region28: #{inner_model_forward.1} parent=1 // pred_region
      %803 = dma.done [#allocation3], 32
    $region29: #{inner_model_forward.1} parent=1 // pred_fallthru
      _
    // Predicated region
    $region30: #{inner_model_forward.1} parent=1 // pred_check
      _
    $region31: #{inner_model_forward.1} parent=1 // pred_check_branch
      %805 = sbr.rel (0) target = $region33
    $region32: #{inner_model_forward.1} parent=1 // pred_region
      %806 = dma.done [#allocation5], 32
    $region33: #{inner_model_forward.1} parent=1 // pred_fallthru
      _
    // Predicated region
    $region34: #{inner_model_forward.1} parent=1 // pred_check
      _
    $region35: #{inner_model_forward.1} parent=1 // pred_check_branch
      %808 = sbr.rel (0) target = $region37
    $region36: #{inner_model_forward.1} parent=1 // pred_region
      _
    $region37: #{inner_model_forward.1} parent=1 // pred_fallthru
      _
    %809 = vsyncpa [#allocation3], 1
    %810 = vsyncpa [#allocation5], 1

</llo_original>
